<compile_context>
chip_gen: v6e
topology: v6e:2x2x1
jax: 0.10.0
libtpu: 0.0.40
codegen_flags: <defaults>
</compile_context>

<pallas_src>
import functools
import math

import jax
import jax.numpy as jnp
from jax.experimental import pallas as pl
from jax.experimental.pallas import tpu as pltpu

LEAKY_SLOPE = 0.01   # F.leaky_relu default
BN_EPS = 1e-5        # nn.BatchNorm1d default

# Row offsets of each layer inside the packed parameter slabs.  Weights are
# stored feature-major, i.e. (out_features, in_features).  All offsets are
# multiples of 16 so every static slice starts on a bf16 (16, 128) tile row.
ROW_W1, ROW_W2, ROW_W22, ROW_W3, ROW_W4, ROW_W5, ROW_W6 = 0, 64, 96, 128, 144, 176, 208
SLAB_ROWS = 224   # 216 used rows, padded to a multiple of 16
SLAB_COLS = 64    # max in_features


def _lrelu(v):
    return jnp.where(v > 0, v, LEAKY_SLOPE * v)


def _round_up(a, b):
    return ((a + b - 1) // b) * b


def ae4_kernel(x_ref, w_ref, b_ref, out_ref):
    """Feature-major autoencoder forward for one batch tile.

    x_ref  : (8, T)        f32   input tile (batch on the 128-lane axis)
    w_ref  : (224, 64)     bf16  packed weight slab, (out, in) per layer
    b_ref  : (224, 1)      f32   packed bias slab (column vectors)
    out_ref: (16, T)       f32   rows 0:8 reconstruction, rows 8:16 bottleneck(+pad)
    """

    def dense(h, row, out_f, in_f):
        w = w_ref[row:row + out_f, 0:in_f]                      # bf16 (out_f, in_f)
        b = b_ref[row:row + out_f, :]                           # f32  (out_f, 1)
        return jnp.dot(w, h.astype(jnp.bfloat16),
                       preferred_element_type=jnp.float32) + b  # (out_f, T) f32

    x = x_ref[...]                                              # (8, T) f32
    h = _lrelu(dense(x, ROW_W1, 64, 8))                         # linear1
    h = _lrelu(dense(h, ROW_W2, 32, 64))                        # linear2 + folded BN, dropout1=id
    h = _lrelu(dense(h, ROW_W22, 32, 32))                       # linear22
    bott8 = dense(h, ROW_W3, 8, 32)                             # linear3, rows 3..7 exactly zero
    h = _lrelu(dense(bott8, ROW_W4, 32, 8))                     # linear4 (padded in-cols 3..7 zero)
    h = _lrelu(dense(h, ROW_W5, 32, 32))                        # linear5, dropout2(p=0)=id
    out = dense(h, ROW_W6, 8, 32)                               # linear6

    # Lane-dense writeback: each store is whole (8, 128) vreg tiles.
    out_ref[0:8, :] = out
    out_ref[8:16, :] = bott8


def _pack_params(params):
    """Fold eval-mode BN into linear2 and pack all weights/biases into two slabs."""
    scale = params["bn_gamma"] * jax.lax.rsqrt(params["bn_rvar"] + BN_EPS)      # (32,)
    w2f = params["w2"] * scale[:, None]                                          # (32, 64)
    b2f = (params["b2"] - params["bn_rmean"]) * scale + params["bn_beta"]        # (32,)

    w_slab = jnp.zeros((SLAB_ROWS, SLAB_COLS), jnp.float32)
    b_slab = jnp.zeros((SLAB_ROWS, 1), jnp.float32)

    def put(ws, bs, row, w, b):
        o, _ = w.shape
        ws = jax.lax.dynamic_update_slice(ws, w, (row, 0))
        bs = jax.lax.dynamic_update_slice(bs, b.reshape(o, 1), (row, 0))
        return ws, bs

    w_slab, b_slab = put(w_slab, b_slab, ROW_W1, params["w1"], params["b1"])
    w_slab, b_slab = put(w_slab, b_slab, ROW_W2, w2f, b2f)
    w_slab, b_slab = put(w_slab, b_slab, ROW_W22, params["w22"], params["b22"])
    w_slab, b_slab = put(w_slab, b_slab, ROW_W3, params["w3"], params["b3"])
    w_slab, b_slab = put(w_slab, b_slab, ROW_W4, params["w4"], params["b4"])
    w_slab, b_slab = put(w_slab, b_slab, ROW_W5, params["w5"], params["b5"])
    w_slab, b_slab = put(w_slab, b_slab, ROW_W6, params["w6"], params["b6"])
    return w_slab.astype(jnp.bfloat16), b_slab


def _choose_tile(n, tile_cap):
    """Balanced batch tile: multiple of 128 lanes, >=2 grid steps when possible."""
    tile_cap = max(128, int(tile_cap))
    steps = max(1, -(-n // tile_cap))
    if steps < 2 and n > 128:
        steps = 2                                  # megacore: give both TCs work
    tile = _round_up(max(1, -(-n // steps)), 128)  # balanced, lane-aligned
    steps = max(1, -(-n // tile))
    return tile, steps


@functools.partial(jax.jit, static_argnames=("tile_n",))
def ae4_forward(x, params, *, tile_n=8192):
    """x: (N, 8) float32.  Returns (reconstruction (N, 8), bottleneck (N, 3))."""
    N, D_in = x.shape
    assert D_in == 8

    tile, steps = _choose_tile(N, tile_n)
    n_pad = tile * steps

    # Feature-major input: batch on the lane axis.
    x_t = jnp.pad(x.T, ((0, 0), (0, n_pad - N)))                 # (8, n_pad)
    w_slab, b_slab = _pack_params(params)

    grid_spec = pltpu.PrefetchScalarGridSpec(
        num_scalar_prefetch=0,
        grid=(steps,),
        in_specs=[
            pl.BlockSpec((8, tile), lambda i: (0, i)),
            pl.BlockSpec((SLAB_ROWS, SLAB_COLS), lambda i: (0, 0)),
            pl.BlockSpec((SLAB_ROWS, 1), lambda i: (0, 0)),
        ],
        out_specs=pl.BlockSpec((16, tile), lambda i: (0, i)),
    )

    comb = pl.pallas_call(
        ae4_kernel,
        out_shape=jax.ShapeDtypeStruct((16, n_pad), jnp.float32),
        grid_spec=grid_spec,
        compiler_params=pltpu.CompilerParams(
            dimension_semantics=("parallel",),
            vmem_limit_bytes=32 * 1024 * 1024,
        ),
    )(x_t, w_slab, b_slab)

    out = comb[0:8, :N].T        # (N, 8)
    bott = comb[8:11, :N].T      # (N, 3)
    return out, bott


def init_params(key):
    """Deterministic synthetic parameters, PyTorch layout: W (out, in), b (out,)."""
    layer_dims = [("1", 8, 64), ("2", 64, 32), ("22", 32, 32), ("3", 32, 3),
                  ("4", 3, 32), ("5", 32, 32), ("6", 32, 8)]
    params = {}
    keys = jax.random.split(key, len(layer_dims))
    for (name, fin, fout), k in zip(layer_dims, keys):
        kw, kb = jax.random.split(k)
        bound = 1.0 / math.sqrt(fin)
        params["w" + name] = jax.random.uniform(
            kw, (fout, fin), jnp.float32, minval=-bound, maxval=bound)
        params["b" + name] = jax.random.uniform(
            kb, (fout,), jnp.float32, minval=-bound, maxval=bound)

    # BatchNorm1d(32) eval-mode params (PyTorch defaults).
    params["bn_gamma"] = jnp.ones((32,), jnp.float32)
    params["bn_beta"] = jnp.zeros((32,), jnp.float32)
    params["bn_rmean"] = jnp.zeros((32,), jnp.float32)
    params["bn_rvar"] = jnp.ones((32,), jnp.float32)
    return params


def _reference_forward(x, p):
    """Pure-JAX f32 reference (un-folded BN, batch-major) for validation."""
    lr = lambda v: jnp.where(v > 0, v, LEAKY_SLOPE * v)
    h1 = lr(x @ p["w1"].T + p["b1"])
    h2 = h1 @ p["w2"].T + p["b2"]
    h2 = (h2 - p["bn_rmean"]) * jax.lax.rsqrt(p["bn_rvar"] + BN_EPS)
    h2 = lr(h2 * p["bn_gamma"] + p["bn_beta"])
    h2 = lr(h2 @ p["w22"].T + p["b22"])
    bott = h2 @ p["w3"].T + p["b3"]
    h3 = lr(bott @ p["w4"].T + p["b4"])
    h4 = lr(h3 @ p["w5"].T + p["b5"])
    out = h4 @ p["w6"].T + p["b6"]
    return out, bott


if __name__ == "__main__":
    key = jax.random.PRNGKey(0)
    k_param, k_x = jax.random.split(key)

    params = init_params(k_param)
    N = 300                                   # not a multiple of the tile: tests padding path
    x = jax.random.normal(k_x, (N, 8), jnp.float32)

    out, bottleneck = ae4_forward(x, params)
    out = jax.block_until_ready(out)
    bottleneck = jax.block_until_ready(bottleneck)

    ref_out, ref_bott = _reference_forward(x, params)
    assert out.shape == (N, 8) and bottleneck.shape == (N, 3)
    # bf16 MXU operands with f32 accumulation -> relaxed tolerance vs f32 reference.
    assert jnp.allclose(out, ref_out, atol=5e-2, rtol=5e-2), \
        float(jnp.max(jnp.abs(out - ref_out)))
    assert jnp.allclose(bottleneck, ref_bott, atol=5e-2, rtol=5e-2), \
        float(jnp.max(jnp.abs(bottleneck - ref_bott)))

    print("KERNEL_OK")
</pallas_src>

<mosaic_0001>
module attributes {stable_mosaic.version = 11 : i64} {
  func.func @ae4_kernel(%arg0: i32, %arg1: memref<8x256xf32, #tpu.memory_space<vmem>>, %arg2: memref<224x64xbf16, #tpu.memory_space<vmem>>, %arg3: memref<224x1xf32, #tpu.memory_space<vmem>>, %arg4: memref<16x256xf32, #tpu.memory_space<vmem>>) attributes {dimension_semantics = [#tpu.dimension_semantics<parallel>], iteration_bounds = array<i64: 2>, scalar_prefetch = 0 : i64, scratch_operands = 0 : i64, tpu.core_type = #tpu.core_type<tc>, window_params = [{transform_indices = @transform_0, window_bounds = array<i64: 8, 256>}, {pipeline_mode = #tpu.pipeline_mode<synchronous>, transform_indices = @transform_1, window_bounds = array<i64: 224, 64>}, {pipeline_mode = #tpu.pipeline_mode<synchronous>, transform_indices = @transform_2, window_bounds = array<i64: 224, 1>}, {transform_indices = @transform_3, window_bounds = array<i64: 16, 256>}]} {
    %c0 = arith.constant 0 : index
    %c0_0 = arith.constant 0 : index
    %0 = vector.load %arg1[%c0, %c0_0] : memref<8x256xf32, #tpu.memory_space<vmem>>, vector<8x256xf32>
    %c0_1 = arith.constant 0 : index
    %c0_2 = arith.constant 0 : index
    %1 = vector.load %arg2[%c0_1, %c0_2] : memref<224x64xbf16, #tpu.memory_space<vmem>>, vector<64x8xbf16>
    %c0_3 = arith.constant 0 : index
    %c0_4 = arith.constant 0 : index
    %2 = vector.load %arg3[%c0_3, %c0_4] : memref<224x1xf32, #tpu.memory_space<vmem>>, vector<64x1xf32>
    %3 = arith.truncf %0 : vector<8x256xf32> to vector<8x256xbf16>
    %cst = arith.constant dense<0.000000e+00> : vector<64x256xf32>
    %4 = tpu.matmul %1, %3, %cst {dimension_numbers = #tpu.dot_dimension_numbers<[1], [0], [0], [1], [0, 0, 1, 1], [], []>} : vector<64x8xbf16>, vector<8x256xbf16>, vector<64x256xf32> -> vector<64x256xf32>
    %5 = vector.broadcast %2 : vector<64x1xf32> to vector<64x256xf32>
    %6 = arith.addf %4, %5 : vector<64x256xf32>
    %cst_5 = arith.constant 0.000000e+00 : f32
    %7 = vector.broadcast %cst_5 : f32 to vector<64x256xf32>
    %8 = arith.cmpf ogt, %6, %7 : vector<64x256xf32>
    %cst_6 = arith.constant 0.00999999977 : f32
    %9 = vector.broadcast %cst_6 : f32 to vector<64x256xf32>
    %10 = arith.mulf %9, %6 : vector<64x256xf32>
    %11 = arith.select %8, %6, %10 : vector<64x256xi1>, vector<64x256xf32>
    %c64 = arith.constant 64 : index
    %c0_7 = arith.constant 0 : index
    %12 = vector.load %arg2[%c64, %c0_7] : memref<224x64xbf16, #tpu.memory_space<vmem>>, vector<32x64xbf16>
    %c64_8 = arith.constant 64 : index
    %c0_9 = arith.constant 0 : index
    %13 = vector.load %arg3[%c64_8, %c0_9] : memref<224x1xf32, #tpu.memory_space<vmem>>, vector<32x1xf32>
    %14 = arith.truncf %11 : vector<64x256xf32> to vector<64x256xbf16>
    %cst_10 = arith.constant dense<0.000000e+00> : vector<32x256xf32>
    %15 = tpu.matmul %12, %14, %cst_10 {dimension_numbers = #tpu.dot_dimension_numbers<[1], [0], [0], [1], [0, 0, 1, 1], [], []>} : vector<32x64xbf16>, vector<64x256xbf16>, vector<32x256xf32> -> vector<32x256xf32>
    %16 = vector.broadcast %13 : vector<32x1xf32> to vector<32x256xf32>
    %17 = arith.addf %15, %16 : vector<32x256xf32>
    %cst_11 = arith.constant 0.000000e+00 : f32
    %18 = vector.broadcast %cst_11 : f32 to vector<32x256xf32>
    %19 = arith.cmpf ogt, %17, %18 : vector<32x256xf32>
    %cst_12 = arith.constant 0.00999999977 : f32
    %20 = vector.broadcast %cst_12 : f32 to vector<32x256xf32>
    %21 = arith.mulf %20, %17 : vector<32x256xf32>
    %22 = arith.select %19, %17, %21 : vector<32x256xi1>, vector<32x256xf32>
    %c96 = arith.constant 96 : index
    %c0_13 = arith.constant 0 : index
    %23 = vector.load %arg2[%c96, %c0_13] : memref<224x64xbf16, #tpu.memory_space<vmem>>, vector<32x32xbf16>
    %c96_14 = arith.constant 96 : index
    %c0_15 = arith.constant 0 : index
    %24 = vector.load %arg3[%c96_14, %c0_15] : memref<224x1xf32, #tpu.memory_space<vmem>>, vector<32x1xf32>
    %25 = arith.truncf %22 : vector<32x256xf32> to vector<32x256xbf16>
    %cst_16 = arith.constant dense<0.000000e+00> : vector<32x256xf32>
    %26 = tpu.matmul %23, %25, %cst_16 {dimension_numbers = #tpu.dot_dimension_numbers<[1], [0], [0], [1], [0, 0, 1, 1], [], []>} : vector<32x32xbf16>, vector<32x256xbf16>, vector<32x256xf32> -> vector<32x256xf32>
    %27 = vector.broadcast %24 : vector<32x1xf32> to vector<32x256xf32>
    %28 = arith.addf %26, %27 : vector<32x256xf32>
    %cst_17 = arith.constant 0.000000e+00 : f32
    %29 = vector.broadcast %cst_17 : f32 to vector<32x256xf32>
    %30 = arith.cmpf ogt, %28, %29 : vector<32x256xf32>
    %cst_18 = arith.constant 0.00999999977 : f32
    %31 = vector.broadcast %cst_18 : f32 to vector<32x256xf32>
    %32 = arith.mulf %31, %28 : vector<32x256xf32>
    %33 = arith.select %30, %28, %32 : vector<32x256xi1>, vector<32x256xf32>
    %c128 = arith.constant 128 : index
    %c0_19 = arith.constant 0 : index
    %34 = vector.load %arg2[%c128, %c0_19] : memref<224x64xbf16, #tpu.memory_space<vmem>>, vector<8x32xbf16>
    %c128_20 = arith.constant 128 : index
    %c0_21 = arith.constant 0 : index
    %35 = vector.load %arg3[%c128_20, %c0_21] : memref<224x1xf32, #tpu.memory_space<vmem>>, vector<8x1xf32>
    %36 = arith.truncf %33 : vector<32x256xf32> to vector<32x256xbf16>
    %cst_22 = arith.constant dense<0.000000e+00> : vector<8x256xf32>
    %37 = tpu.matmul %34, %36, %cst_22 {dimension_numbers = #tpu.dot_dimension_numbers<[1], [0], [0], [1], [0, 0, 1, 1], [], []>} : vector<8x32xbf16>, vector<32x256xbf16>, vector<8x256xf32> -> vector<8x256xf32>
    %38 = vector.broadcast %35 : vector<8x1xf32> to vector<8x256xf32>
    %39 = arith.addf %37, %38 : vector<8x256xf32>
    %c144 = arith.constant 144 : index
    %c0_23 = arith.constant 0 : index
    %40 = vector.load %arg2[%c144, %c0_23] : memref<224x64xbf16, #tpu.memory_space<vmem>>, vector<32x8xbf16>
    %c144_24 = arith.constant 144 : index
    %c0_25 = arith.constant 0 : index
    %41 = vector.load %arg3[%c144_24, %c0_25] : memref<224x1xf32, #tpu.memory_space<vmem>>, vector<32x1xf32>
    %42 = arith.truncf %39 : vector<8x256xf32> to vector<8x256xbf16>
    %cst_26 = arith.constant dense<0.000000e+00> : vector<32x256xf32>
    %43 = tpu.matmul %40, %42, %cst_26 {dimension_numbers = #tpu.dot_dimension_numbers<[1], [0], [0], [1], [0, 0, 1, 1], [], []>} : vector<32x8xbf16>, vector<8x256xbf16>, vector<32x256xf32> -> vector<32x256xf32>
    %44 = vector.broadcast %41 : vector<32x1xf32> to vector<32x256xf32>
    %45 = arith.addf %43, %44 : vector<32x256xf32>
    %cst_27 = arith.constant 0.000000e+00 : f32
    %46 = vector.broadcast %cst_27 : f32 to vector<32x256xf32>
    %47 = arith.cmpf ogt, %45, %46 : vector<32x256xf32>
    %cst_28 = arith.constant 0.00999999977 : f32
    %48 = vector.broadcast %cst_28 : f32 to vector<32x256xf32>
    %49 = arith.mulf %48, %45 : vector<32x256xf32>
    %50 = arith.select %47, %45, %49 : vector<32x256xi1>, vector<32x256xf32>
    %c176 = arith.constant 176 : index
    %c0_29 = arith.constant 0 : index
    %51 = vector.load %arg2[%c176, %c0_29] : memref<224x64xbf16, #tpu.memory_space<vmem>>, vector<32x32xbf16>
    %c176_30 = arith.constant 176 : index
    %c0_31 = arith.constant 0 : index
    %52 = vector.load %arg3[%c176_30, %c0_31] : memref<224x1xf32, #tpu.memory_space<vmem>>, vector<32x1xf32>
    %53 = arith.truncf %50 : vector<32x256xf32> to vector<32x256xbf16>
    %cst_32 = arith.constant dense<0.000000e+00> : vector<32x256xf32>
    %54 = tpu.matmul %51, %53, %cst_32 {dimension_numbers = #tpu.dot_dimension_numbers<[1], [0], [0], [1], [0, 0, 1, 1], [], []>} : vector<32x32xbf16>, vector<32x256xbf16>, vector<32x256xf32> -> vector<32x256xf32>
    %55 = vector.broadcast %52 : vector<32x1xf32> to vector<32x256xf32>
    %56 = arith.addf %54, %55 : vector<32x256xf32>
    %cst_33 = arith.constant 0.000000e+00 : f32
    %57 = vector.broadcast %cst_33 : f32 to vector<32x256xf32>
    %58 = arith.cmpf ogt, %56, %57 : vector<32x256xf32>
    %cst_34 = arith.constant 0.00999999977 : f32
    %59 = vector.broadcast %cst_34 : f32 to vector<32x256xf32>
    %60 = arith.mulf %59, %56 : vector<32x256xf32>
    %61 = arith.select %58, %56, %60 : vector<32x256xi1>, vector<32x256xf32>
    %c208 = arith.constant 208 : index
    %c0_35 = arith.constant 0 : index
    %62 = vector.load %arg2[%c208, %c0_35] : memref<224x64xbf16, #tpu.memory_space<vmem>>, vector<8x32xbf16>
    %c208_36 = arith.constant 208 : index
    %c0_37 = arith.constant 0 : index
    %63 = vector.load %arg3[%c208_36, %c0_37] : memref<224x1xf32, #tpu.memory_space<vmem>>, vector<8x1xf32>
    %64 = arith.truncf %61 : vector<32x256xf32> to vector<32x256xbf16>
    %cst_38 = arith.constant dense<0.000000e+00> : vector<8x256xf32>
    %65 = tpu.matmul %62, %64, %cst_38 {dimension_numbers = #tpu.dot_dimension_numbers<[1], [0], [0], [1], [0, 0, 1, 1], [], []>} : vector<8x32xbf16>, vector<32x256xbf16>, vector<8x256xf32> -> vector<8x256xf32>
    %66 = vector.broadcast %63 : vector<8x1xf32> to vector<8x256xf32>
    %67 = arith.addf %65, %66 : vector<8x256xf32>
    %c0_39 = arith.constant 0 : index
    %c0_40 = arith.constant 0 : index
    %68 = vector.load %arg4[%c0_39, %c0_40] : memref<16x256xf32, #tpu.memory_space<vmem>>, vector<8x256xf32>
    tpu.vector_store %arg4[%c0_39, %c0_40], %67 {strides = array<i32>} : memref<16x256xf32, #tpu.memory_space<vmem>>, vector<8x256xf32>,
    %c8 = arith.constant 8 : index
    %c0_41 = arith.constant 0 : index
    %69 = vector.load %arg4[%c8, %c0_41] : memref<16x256xf32, #tpu.memory_space<vmem>>, vector<8x256xf32>
    tpu.vector_store %arg4[%c8, %c0_41], %39 {strides = array<i32>} : memref<16x256xf32, #tpu.memory_space<vmem>>, vector<8x256xf32>,
    return
  }
  func.func @transform_0(%arg0: i32) -> (i32, i32) {
    %c0_i32 = arith.constant 0 : i32
    %c0_i32_0 = arith.constant 0 : i32
    return %c0_i32, %arg0 : i32, i32
  }
  func.func @transform_1(%arg0: i32) -> (i32, i32) {
    %c0_i32 = arith.constant 0 : i32
    %c0_i32_0 = arith.constant 0 : i32
    %c0_i32_1 = arith.constant 0 : i32
    return %c0_i32, %c0_i32_0 : i32, i32
  }
  func.func @transform_2(%arg0: i32) -> (i32, i32) {
    %c0_i32 = arith.constant 0 : i32
    %c0_i32_0 = arith.constant 0 : i32
    %c0_i32_1 = arith.constant 0 : i32
    return %c0_i32, %c0_i32_0 : i32, i32
  }
  func.func @transform_3(%arg0: i32) -> (i32, i32) {
    %c0_i32 = arith.constant 0 : i32
    %c0_i32_0 = arith.constant 0 : i32
    return %c0_i32, %arg0 : i32, i32
  }
}

</mosaic_0001>

<llo_original>
// kernel: ae4_forward.1
$region0: #{ae4_forward.1}
  #allocation0 [shape = 'u32[]', space=smem, size = 0x4, offset = 0x4, fixed_abs, tag = 'smem constant byte address 0x4 - core index']
  #allocation1 [shape = 'u32[144,128]{1,0:T(1,128)}', space=vmem, size = 0x12000, scoped, tag = 'internal scratch']
  %s0 = inlined_call_operand.vmem [shape: f32[8,512], index: 0, kind: input, shape index: {}]
  %s1 = inlined_call_operand.vmem [shape: bf16[224,64], index: 1, kind: input, shape index: {}]
  %s2 = inlined_call_operand.vmem [shape: f32[224,1], index: 2, kind: input, shape index: {}]
  %s3 = inlined_call_operand.vmem [shape: f32[16,512], index: 3, kind: output, shape index: {}]
  %s4 = sld [smem:[#allocation0]]
  $region64: #{ae4_forward.1} parent=0
    _
  %s6 = ssub.s32 1, %s4
  %s7 = scalar_select 0, %s6, %s4
  $region1: #{ae4_forward.1} parent=0
    #allocation2 [shape = 'u8[32768]{0}', space=vmem, size = 0x8000, scoped, tag = 'output window, operand 0']
    loop: start=0, step=1, limit=4
    $region2: #{ae4_forward.1} parent=1 // loop_pre_header
      _
    $region3: #{ae4_forward.1} parent=1 // loop_header
      %s9 = sphi 0, %s13
      %p10 = scmp.ge.s32.totalorder %s9, 4
      %s19 = sphi 0, %s21
      %s22 = sphi 0, %s19
      %s23 = sphi 0, %s22
      %s39 = sphi 0, %s23
      %s43 = sphi 0, %s43
      %s45 = sphi 0, %s43
      %s46 = sphi 0, %s45
      %s60 = sphi 0, %s46
      %s64 = sphi 0, %s64
      %s66 = sphi 0, %s64
      %s67 = sphi 0, %s66
      %s81 = sphi 0, %s67
      %s87 = sphi 0, %s89
      %s90 = sphi 0, %s87
      %s91 = sphi 0, %s90
      %s107 = sphi 0, %s91
    $region4: #{ae4_forward.1} parent=1 // loop_header_branch
      %12 = sbr.rel (%p10) target = $region8
    $region5: #{ae4_forward.1} parent=1 // loop_body
      %s14 = ssub.s32 %s9, 1
      %s15 = ssub.s32 %s9, 2
      %s16 = sadd.s32 %s9, 1
      %s17 = ssub.s32 %s9, %s16
      %p18 = scmp.eq.s32.totalorder %s17, 0
      %s20 = sadd.s32 %s19, 1
      %s21 = scalar_select %p18, %s19, %s20
      %p24 = pneg %p18
      %p25 = scmp.eq.s32.totalorder %s9, 1
      %p26 = por %p24, %p25
      %p27 = scmp.ne.s32.totalorder %s19, %s22
      %p28 = scmp.eq.s32.totalorder %s9, 0
      %p29 = por %p27, %p28
      %p30 = scmp.ne.s32.totalorder %s19, %s22
      %p31 = scmp.eq.s32.totalorder %s14, 1
      %p32 = por %p30, %p31
      %p33 = scmp.ne.s32.totalorder %s22, %s23
      %p34 = scmp.eq.s32.totalorder %s14, 0
      %p35 = por %p33, %p34
      %p36 = scmp.ne.s32.totalorder %s22, %s23
      %p37 = scmp.eq.s32.totalorder %s15, 1
      %p38 = por %p36, %p37
      %p40 = scmp.ne.s32.totalorder %s23, %s39
      %p41 = scmp.eq.s32.totalorder %s15, 0
      %p42 = por %p40, %p41
      %s44 = sadd.s32 %s43, 1
      %p47 = scmp.eq.s32.totalorder %s9, 1
      %p48 = scmp.ne.s32.totalorder %s43, %s45
      %p49 = scmp.eq.s32.totalorder %s9, 0
      %p50 = por %p48, %p49
      %p51 = scmp.ne.s32.totalorder %s43, %s45
      %p52 = scmp.eq.s32.totalorder %s14, 1
      %p53 = por %p51, %p52
      %p54 = scmp.ne.s32.totalorder %s45, %s46
      %p55 = scmp.eq.s32.totalorder %s14, 0
      %p56 = por %p54, %p55
      %p57 = scmp.ne.s32.totalorder %s45, %s46
      %p58 = scmp.eq.s32.totalorder %s15, 1
      %p59 = por %p57, %p58
      %p61 = scmp.ne.s32.totalorder %s46, %s60
      %p62 = scmp.eq.s32.totalorder %s15, 0
      %p63 = por %p61, %p62
      %s65 = sadd.s32 %s64, 1
      %p68 = scmp.eq.s32.totalorder %s9, 1
      %p69 = scmp.ne.s32.totalorder %s64, %s66
      %p70 = scmp.eq.s32.totalorder %s9, 0
      %p71 = por %p69, %p70
      %p72 = scmp.ne.s32.totalorder %s64, %s66
      %p73 = scmp.eq.s32.totalorder %s14, 1
      %p74 = por %p72, %p73
      %p75 = scmp.ne.s32.totalorder %s66, %s67
      %p76 = scmp.eq.s32.totalorder %s14, 0
      %p77 = por %p75, %p76
      %p78 = scmp.ne.s32.totalorder %s66, %s67
      %p79 = scmp.eq.s32.totalorder %s15, 1
      %p80 = por %p78, %p79
      %p82 = scmp.ne.s32.totalorder %s67, %s81
      %p83 = scmp.eq.s32.totalorder %s15, 0
      %p84 = por %p82, %p83
      %s85 = ssub.s32 %s9, %s16
      %p86 = scmp.eq.s32.totalorder %s85, 0
      %s88 = sadd.s32 %s87, 1
      %s89 = scalar_select %p86, %s87, %s88
      %p92 = pneg %p86
      %p93 = scmp.eq.s32.totalorder %s9, 1
      %p94 = por %p92, %p93
      %p95 = scmp.ne.s32.totalorder %s87, %s90
      %p96 = scmp.eq.s32.totalorder %s9, 0
      %p97 = por %p95, %p96
      %p98 = scmp.ne.s32.totalorder %s87, %s90
      %p99 = scmp.eq.s32.totalorder %s14, 1
      %p100 = por %p98, %p99
      %p101 = scmp.ne.s32.totalorder %s90, %s91
      %p102 = scmp.eq.s32.totalorder %s14, 0
      %p103 = por %p101, %p102
      %p104 = scmp.ne.s32.totalorder %s90, %s91
      %p105 = scmp.eq.s32.totalorder %s15, 1
      %p106 = por %p104, %p105
      %p108 = scmp.ne.s32.totalorder %s91, %s107
      %p109 = scmp.eq.s32.totalorder %s15, 0
      %p110 = por %p108, %p109
      %p111 = scmp.le.s32.totalorder 1, %s9
      %p112 = scmp.lt.s32.totalorder %s9, 3
      %p113 = pnand %p111, %p112
      %p114 = pneg %p113
      // Predicated region
      $region9: #{ae4_forward.1} parent=5 // pred_check
        _
      $region10: #{ae4_forward.1} parent=5 // pred_check_branch
        %116 = sbr.rel (%p113) target = $region12
      $region11: #{ae4_forward.1} parent=5 // pred_region
        %s117 = ssub.s32 %s9, 1
        // Predicated region
        $region13: #{ae4_forward.1} parent=11 // pred_check
          %p118 = pneg %p56
        $region14: #{ae4_forward.1} parent=11 // pred_check_branch
          %120 = sbr.rel (%p118) target = $region16
        $region15: #{ae4_forward.1} parent=11 // pred_region
          _
        $region16: #{ae4_forward.1} parent=11 // pred_fallthru
          _
        // Predicated region
        $region17: #{ae4_forward.1} parent=11 // pred_check
          %p121 = pneg %p77
        $region18: #{ae4_forward.1} parent=11 // pred_check_branch
          %123 = sbr.rel (%p121) target = $region20
        $region19: #{ae4_forward.1} parent=11 // pred_region
          _
        $region20: #{ae4_forward.1} parent=11 // pred_fallthru
          _
      $region12: #{ae4_forward.1} parent=5 // pred_fallthru
        _
      %p124 = scmp.lt.s32.totalorder %s9, 2
      // Predicated region
      $region21: #{ae4_forward.1} parent=5 // pred_check
        %p125 = pneg %p124
      $region22: #{ae4_forward.1} parent=5 // pred_check_branch
        %127 = sbr.rel (%p125) target = $region24
      $region23: #{ae4_forward.1} parent=5 // pred_region
        // Predicated region
        $region25: #{ae4_forward.1} parent=23 // pred_check
          %p128 = pneg %p29
        $region26: #{ae4_forward.1} parent=23 // pred_check_branch
          %130 = sbr.rel (%p128) target = $region28
        $region27: #{ae4_forward.1} parent=23 // pred_region
          %s131 = smul.u32 2, %s9
          %p132 = scmp.lt.s32.totalorder %s131, 3
          %s133 = scalar_select %p132, %s131, 3
          %s134 = smul.addr %s133, 8
          %s135 = scalar_lea.vmem %s0, %s134
          %s136 = smul.u32 2, %s9
        $region28: #{ae4_forward.1} parent=23 // pred_fallthru
          _
      $region24: #{ae4_forward.1} parent=5 // pred_fallthru
        _
      %p137 = scmp.le.s32.totalorder 1, %s9
      %p138 = scmp.lt.s32.totalorder %s9, 3
      %p139 = pnand %p137, %p138
      %p140 = pneg %p139
      // Predicated region
      $region29: #{ae4_forward.1} parent=5 // pred_check
        _
      $region30: #{ae4_forward.1} parent=5 // pred_check_branch
        %142 = sbr.rel (%p139) target = $region32
      $region31: #{ae4_forward.1} parent=5 // pred_region
        %s143 = ssub.s32 %s9, 1
        %s144 = smul.u32 2, %s14
        %p145 = scmp.lt.s32.totalorder %s144, 3
        %s146 = scalar_select %p145, %s144, 3
        %s147 = smul.addr %s146, 8
        %s148 = scalar_lea.vmem %s0, %s147
        %p149 = pneg %p35
        %p150 = pneg %p32
        %p151 = pneg %p56
        %p152 = pneg %p53
        %p153 = pneg %p77
        %p154 = pneg %p74
        %p155 = pneg %p103
        %p156 = pneg %p100
        %s157 = sand.u32 %s90, 1
        %s158 = sand.u32 %s90, 1
        %s159 = smul.addr %s158, 32
        %s160 = scalar_lea.vmem [#allocation2], %s159
        %s161 = smul.u32 2, %s14
        %p162 = scmp.lt.s32.totalorder %s161, 3
        %s163 = scalar_select %p162, %s161, 3
        %s164 = smul.addr %s163, 8
        %s165 = scalar_lea.vmem %s0, %s164
        %s166 = smul.u32 2, %s14
        %s167 = smul.u32 2, %s14
        %v169 = vld [vmem:[%s165] sm:$0xff]
        %v170 = vld [vmem:[%s165 + $0x8] sm:$0xff]
        %v171 = vld [vmem:[%s1] sm:$0xf]
        %v172 = vld [vmem:[%s1 + $0x4] sm:$0xf]
        %v173 = vld [vmem:[%s1 + $0x8] sm:$0xf]
        %v174 = vld [vmem:[%s1 + $0xc] sm:$0xf]
        %v175 = vld [vmem:[%s1 + $0x10] sm:$0xf]
        %v176 = vld [vmem:[%s1 + $0x14] sm:$0xf]
        %v177 = vld [vmem:[%s1 + $0x18] sm:$0xf]
        %v178 = vld [vmem:[%s1 + $0x1c] sm:$0xf]
        %v179 = vld [vmem:[%s2] sm:$0xff]
        %v180 = vld [vmem:[%s2 + $0x8] sm:$0xff]
        %v181 = vld [vmem:[%s2 + $0x10] sm:$0xff]
        %v182 = vld [vmem:[%s2 + $0x18] sm:$0xff]
        %v183 = vld [vmem:[%s2 + $0x20] sm:$0xff]
        %v184 = vld [vmem:[%s2 + $0x28] sm:$0xff]
        %v185 = vld [vmem:[%s2 + $0x30] sm:$0xff]
        %v186 = vld [vmem:[%s2 + $0x38] sm:$0xff]
        %v187 = vpack.c.bf16 %v169, %v169
        %v188 = vpack.c.bf16 %v170, %v170
        %190 = vset.pattern.permute.xlu0 0
        %191 = vperm.xlu0 %190, %v179
        %v192 = vpop.permute.xlu0 %191
        %195 = vset.pattern.permute.xlu0 0
        %196 = vperm.xlu0 %195, %v180
        %v197 = vpop.permute.xlu0 %196
        %200 = vset.pattern.permute.xlu0 0
        %201 = vperm.xlu0 %200, %v181
        %v202 = vpop.permute.xlu0 %201
        %205 = vset.pattern.permute.xlu0 0
        %206 = vperm.xlu0 %205, %v182
        %v207 = vpop.permute.xlu0 %206
        %210 = vset.pattern.permute.xlu0 0
        %211 = vperm.xlu0 %210, %v183
        %v212 = vpop.permute.xlu0 %211
        %215 = vset.pattern.permute.xlu0 0
        %216 = vperm.xlu0 %215, %v184
        %v217 = vpop.permute.xlu0 %216
        %220 = vset.pattern.permute.xlu0 0
        %221 = vperm.xlu0 %220, %v185
        %v222 = vpop.permute.xlu0 %221
        %225 = vset.pattern.permute.xlu0 0
        %226 = vperm.xlu0 %225, %v186
        %v227 = vpop.permute.xlu0 %226
        %v237 = vunpack.c.l.b16 %v171
        %v238 = vunpack.c.l.b16 %v172
        %v239 = vunpack.c.l.b16 %v173
        %v240 = vunpack.c.l.b16 %v174
        %v241 = vunpack.c.l.b16 %v175
        %v242 = vunpack.c.l.b16 %v176
        %v243 = vunpack.c.l.b16 %v177
        %v244 = vunpack.c.l.b16 %v178
        %v245 = vpack.c.b16 %v238, %v237
        %v246 = vpack.c.b16 %v240, %v239
        %v247 = vpack.c.b16 %v242, %v241
        %v248 = vpack.c.b16 %v244, %v243
        %vm249 = vcmask 64512
        %v251 = vsel %vm249, %v245, 0
        %v254 = vsel %vm249, %v246, 0
        %v257 = vsel %vm249, %v247, 0
        %v260 = vsel %vm249, %v248, 0
        %vm262 = vcmask 1043456
        %v264 = vsel %vm262, %v187, 0
        %v267 = vsel %vm262, %v188, 0
        %269 = vmatprep.subr.bf16.mxu0 0
        %270 = vmatpush1.bf16.msra.mxu0 0
        %271 = vmatprep.subr.bf16.mxu0 0
        %272 = vmatpush1.bf16.msra.mxu0 0
        %273 = vmatprep.subr.bf16.mxu0 0
        %274 = vmatpush1.bf16.msra.mxu0 0
        %275 = vmatprep.subr.bf16.mxu0 0
        %276 = vmatpush1.bf16.msra.mxu0 0
        %277 = vmatprep.subr.bf16.mxu0 0
        %278 = vmatpush1.bf16.msra.mxu0 0
        %279 = vmatprep.subr.bf16.mxu0 0
        %280 = vmatpush1.bf16.msra.mxu0 0
        %281 = vmatprep.subr.bf16.mxu0 0
        %282 = vmatpush1.bf16.msra.mxu0 0
        %283 = vmatprep.subr.bf16.mxu0 %v267
        %284 = vmatpush1.bf16.msra.mxu0 %v264
        %285 = vmatprep.subr.bf16.mxu0 0
        %286 = vmatpush2.bf16.msra.mxu0 0
        %287 = vmatprep.subr.bf16.mxu0 0
        %288 = vmatpush2.bf16.msra.mxu0 0
        %289 = vmatprep.subr.bf16.mxu0 0
        %290 = vmatpush2.bf16.msra.mxu0 0
        %291 = vmatprep.subr.bf16.mxu0 0
        %292 = vmatpush2.bf16.msra.mxu0 0
        %293 = vmatprep.subr.bf16.mxu0 0
        %294 = vmatpush2.bf16.msra.mxu0 0
        %295 = vmatprep.subr.bf16.mxu0 0
        %296 = vmatpush2.bf16.msra.mxu0 0
        %297 = vmatprep.subr.bf16.mxu0 0
        %298 = vmatpush2.bf16.msra.mxu0 0
        %299 = vmatprep.subr.bf16.mxu0 0
        %300 = vmatpush2.bf16.msra.mxu0 0
        %301 = vmatprep.mubr.bf16.mxu0 0
        %302 = vmatmul.mubr.bf16.gmra.mxu0 %v251
        %v303 = vpop.f32.mrf.mxu0
        %v304 = vadd.f32 %v192, %v303
        %v305 = vpop.f32.mrf.mxu0
        %v306 = vadd.f32 %v192, %v305
        %v307 = vpop.f32.mrf.mxu0
        %v308 = vadd.f32 %v197, %v307
        %v309 = vpop.f32.mrf.mxu0
        %v310 = vadd.f32 %v197, %v309
        %311 = vmatprep.mubr.bf16.mxu0 0
        %312 = vmatmul.mubr.bf16.gmra.mxu0 %v254
        %v313 = vpop.f32.mrf.mxu0
        %v314 = vadd.f32 %v202, %v313
        %v315 = vpop.f32.mrf.mxu0
        %v316 = vadd.f32 %v202, %v315
        %v317 = vpop.f32.mrf.mxu0
        %v318 = vadd.f32 %v207, %v317
        %v319 = vpop.f32.mrf.mxu0
        %v320 = vadd.f32 %v207, %v319
        %321 = vmatprep.mubr.bf16.mxu0 0
        %322 = vmatmul.mubr.bf16.gmra.mxu0 %v257
        %v323 = vpop.f32.mrf.mxu0
        %v324 = vadd.f32 %v212, %v323
        %v325 = vpop.f32.mrf.mxu0
        %v326 = vadd.f32 %v212, %v325
        %v327 = vpop.f32.mrf.mxu0
        %v328 = vadd.f32 %v217, %v327
        %v329 = vpop.f32.mrf.mxu0
        %v330 = vadd.f32 %v217, %v329
        %331 = vmatprep.mubr.bf16.mxu0 0
        %332 = vmatmul.mubr.bf16.gmra.mxu0 %v260
        %v333 = vpop.f32.mrf.mxu0
        %v334 = vadd.f32 %v222, %v333
        %v335 = vpop.f32.mrf.mxu0
        %v336 = vadd.f32 %v222, %v335
        %v337 = vpop.f32.mrf.mxu0
        %v338 = vadd.f32 %v227, %v337
        %v339 = vpop.f32.mrf.mxu0
        %v340 = vadd.f32 %v227, %v339
        %341 = vdwg.mxu0
        %vm342 = vcmp.gt.f32.partialorder %v304, 0.0
        %vm343 = vcmp.gt.f32.partialorder %v306, 0.0
        %vm344 = vcmp.gt.f32.partialorder %v308, 0.0
        %vm345 = vcmp.gt.f32.partialorder %v310, 0.0
        %vm346 = vcmp.gt.f32.partialorder %v314, 0.0
        %vm347 = vcmp.gt.f32.partialorder %v316, 0.0
        %vm348 = vcmp.gt.f32.partialorder %v318, 0.0
        %vm349 = vcmp.gt.f32.partialorder %v320, 0.0
        %vm350 = vcmp.gt.f32.partialorder %v324, 0.0
        %vm351 = vcmp.gt.f32.partialorder %v326, 0.0
        %vm352 = vcmp.gt.f32.partialorder %v328, 0.0
        %vm353 = vcmp.gt.f32.partialorder %v330, 0.0
        %vm354 = vcmp.gt.f32.partialorder %v334, 0.0
        %vm355 = vcmp.gt.f32.partialorder %v336, 0.0
        %vm356 = vcmp.gt.f32.partialorder %v338, 0.0
        %vm357 = vcmp.gt.f32.partialorder %v340, 0.0
        %v358 = vmul.f32 %v304, 0.01
        %v359 = vmul.f32 %v306, 0.01
        %v360 = vmul.f32 %v308, 0.01
        %v361 = vmul.f32 %v310, 0.01
        %v362 = vmul.f32 %v314, 0.01
        %v363 = vmul.f32 %v316, 0.01
        %v364 = vmul.f32 %v318, 0.01
        %v365 = vmul.f32 %v320, 0.01
        %v366 = vmul.f32 %v324, 0.01
        %v367 = vmul.f32 %v326, 0.01
        %v368 = vmul.f32 %v328, 0.01
        %v369 = vmul.f32 %v330, 0.01
        %v370 = vmul.f32 %v334, 0.01
        %v371 = vmul.f32 %v336, 0.01
        %v372 = vmul.f32 %v338, 0.01
        %v373 = vmul.f32 %v340, 0.01
        %v374 = vsel %vm342, %v304, %v358
        %v375 = vsel %vm343, %v306, %v359
        %v376 = vsel %vm344, %v308, %v360
        %v377 = vsel %vm345, %v310, %v361
        %v378 = vsel %vm346, %v314, %v362
        %v379 = vsel %vm347, %v316, %v363
        %v380 = vsel %vm348, %v318, %v364
        %v381 = vsel %vm349, %v320, %v365
        %v382 = vsel %vm350, %v324, %v366
        %v383 = vsel %vm351, %v326, %v367
        %v384 = vsel %vm352, %v328, %v368
        %v385 = vsel %vm353, %v330, %v369
        %v386 = vsel %vm354, %v334, %v370
        %v387 = vsel %vm355, %v336, %v371
        %v388 = vsel %vm356, %v338, %v372
        %v389 = vsel %vm357, %v340, %v373
        %v390 = vld [vmem:[%s1 + $0x20] sm:$0xf]
        %v391 = vld [vmem:[%s1 + $0x24] sm:$0xf]
        %v392 = vld [vmem:[%s1 + $0x28] sm:$0xf]
        %v393 = vld [vmem:[%s1 + $0x2c] sm:$0xf]
        %v394 = vld [vmem:[%s2 + $0x40] sm:$0xff]
        %v395 = vld [vmem:[%s2 + $0x48] sm:$0xff]
        %v396 = vld [vmem:[%s2 + $0x50] sm:$0xff]
        %v397 = vld [vmem:[%s2 + $0x58] sm:$0xff]
        %v398 = vpack.c.bf16 %v376, %v374
        %v399 = vpack.c.bf16 %v377, %v375
        %v400 = vpack.c.bf16 %v380, %v378
        %v401 = vpack.c.bf16 %v381, %v379
        %v402 = vpack.c.bf16 %v384, %v382
        %v403 = vpack.c.bf16 %v385, %v383
        %v404 = vpack.c.bf16 %v388, %v386
        %v405 = vpack.c.bf16 %v389, %v387
        %407 = vset.pattern.permute.xlu0 0
        %408 = vperm.xlu0 %407, %v394
        %v409 = vpop.permute.xlu0 %408
        %412 = vset.pattern.permute.xlu0 0
        %413 = vperm.xlu0 %412, %v395
        %v414 = vpop.permute.xlu0 %413
        %417 = vset.pattern.permute.xlu0 0
        %418 = vperm.xlu0 %417, %v396
        %v419 = vpop.permute.xlu0 %418
        %422 = vset.pattern.permute.xlu0 0
        %423 = vperm.xlu0 %422, %v397
        %v424 = vpop.permute.xlu0 %423
        %v430 = vunpack.c.l.b16 %v390
        %v431 = vunpack.c.l.b16 %v391
        %v432 = vunpack.c.l.b16 %v392
        %v433 = vunpack.c.l.b16 %v393
        %v434 = vpack.c.b16 %v431, %v430
        %v435 = vpack.c.b16 %v433, %v432
        %vm436 = vcmask 523264
        %v438 = vsel %vm436, %v434, 0
        %v441 = vsel %vm436, %v435, 0
        %443 = vmatprep.subr.bf16.mxu0 0
        %444 = vmatpush1.bf16.msra.mxu0 0
        %445 = vmatprep.subr.bf16.mxu0 0
        %446 = vmatpush1.bf16.msra.mxu0 0
        %447 = vmatprep.subr.bf16.mxu0 0
        %448 = vmatpush1.bf16.msra.mxu0 0
        %449 = vmatprep.subr.bf16.mxu0 0
        %450 = vmatpush1.bf16.msra.mxu0 0
        %451 = vmatprep.subr.bf16.mxu0 %v405
        %452 = vmatpush1.bf16.msra.mxu0 %v404
        %453 = vmatprep.subr.bf16.mxu0 %v403
        %454 = vmatpush1.bf16.msra.mxu0 %v402
        %455 = vmatprep.subr.bf16.mxu0 %v401
        %456 = vmatpush1.bf16.msra.mxu0 %v400
        %457 = vmatprep.subr.bf16.mxu0 %v399
        %458 = vmatpush1.bf16.msra.mxu0 %v398
        %459 = vmatprep.subr.bf16.mxu0 0
        %460 = vmatpush2.bf16.msra.mxu0 0
        %461 = vmatprep.subr.bf16.mxu0 0
        %462 = vmatpush2.bf16.msra.mxu0 0
        %463 = vmatprep.subr.bf16.mxu0 0
        %464 = vmatpush2.bf16.msra.mxu0 0
        %465 = vmatprep.subr.bf16.mxu0 0
        %466 = vmatpush2.bf16.msra.mxu0 0
        %467 = vmatprep.subr.bf16.mxu0 0
        %468 = vmatpush2.bf16.msra.mxu0 0
        %469 = vmatprep.subr.bf16.mxu0 0
        %470 = vmatpush2.bf16.msra.mxu0 0
        %471 = vmatprep.subr.bf16.mxu0 0
        %472 = vmatpush2.bf16.msra.mxu0 0
        %473 = vmatprep.subr.bf16.mxu0 0
        %474 = vmatpush2.bf16.msra.mxu0 0
        %475 = vmatprep.mubr.bf16.mxu0 0
        %476 = vmatmul.mubr.bf16.gmra.mxu0 %v438
        %v477 = vpop.f32.mrf.mxu0
        %v478 = vadd.f32 %v409, %v477
        %v479 = vpop.f32.mrf.mxu0
        %v480 = vadd.f32 %v409, %v479
        %v481 = vpop.f32.mrf.mxu0
        %v482 = vadd.f32 %v414, %v481
        %v483 = vpop.f32.mrf.mxu0
        %v484 = vadd.f32 %v414, %v483
        %485 = vmatprep.mubr.bf16.mxu0 0
        %486 = vmatmul.mubr.bf16.gmra.mxu0 %v441
        %v487 = vpop.f32.mrf.mxu0
        %v488 = vadd.f32 %v419, %v487
        %v489 = vpop.f32.mrf.mxu0
        %v490 = vadd.f32 %v419, %v489
        %v491 = vpop.f32.mrf.mxu0
        %v492 = vadd.f32 %v424, %v491
        %v493 = vpop.f32.mrf.mxu0
        %v494 = vadd.f32 %v424, %v493
        %495 = vdwg.mxu0
        %vm496 = vcmp.gt.f32.partialorder %v478, 0.0
        %vm497 = vcmp.gt.f32.partialorder %v480, 0.0
        %vm498 = vcmp.gt.f32.partialorder %v482, 0.0
        %vm499 = vcmp.gt.f32.partialorder %v484, 0.0
        %vm500 = vcmp.gt.f32.partialorder %v488, 0.0
        %vm501 = vcmp.gt.f32.partialorder %v490, 0.0
        %vm502 = vcmp.gt.f32.partialorder %v492, 0.0
        %vm503 = vcmp.gt.f32.partialorder %v494, 0.0
        %v504 = vmul.f32 %v478, 0.01
        %v505 = vmul.f32 %v480, 0.01
        %v506 = vmul.f32 %v482, 0.01
        %v507 = vmul.f32 %v484, 0.01
        %v508 = vmul.f32 %v488, 0.01
        %v509 = vmul.f32 %v490, 0.01
        %v510 = vmul.f32 %v492, 0.01
        %v511 = vmul.f32 %v494, 0.01
        %v512 = vsel %vm496, %v478, %v504
        %v513 = vsel %vm497, %v480, %v505
        %v514 = vsel %vm498, %v482, %v506
        %v515 = vsel %vm499, %v484, %v507
        %v516 = vsel %vm500, %v488, %v508
        %v517 = vsel %vm501, %v490, %v509
        %v518 = vsel %vm502, %v492, %v510
        %v519 = vsel %vm503, %v494, %v511
        %v520 = vld [vmem:[%s1 + $0x30] sm:$0xf]
        %v521 = vld [vmem:[%s1 + $0x34] sm:$0xf]
        %v522 = vld [vmem:[%s1 + $0x38] sm:$0xf]
        %v523 = vld [vmem:[%s1 + $0x3c] sm:$0xf]
        %v524 = vld [vmem:[%s2 + $0x60] sm:$0xff]
        %v525 = vld [vmem:[%s2 + $0x68] sm:$0xff]
        %v526 = vld [vmem:[%s2 + $0x70] sm:$0xff]
        %v527 = vld [vmem:[%s2 + $0x78] sm:$0xff]
        %v528 = vpack.c.bf16 %v514, %v512
        %v529 = vpack.c.bf16 %v515, %v513
        %v530 = vpack.c.bf16 %v518, %v516
        %v531 = vpack.c.bf16 %v519, %v517
        %533 = vset.pattern.permute.xlu0 0
        %534 = vperm.xlu0 %533, %v524
        %v535 = vpop.permute.xlu0 %534
        %538 = vset.pattern.permute.xlu0 0
        %539 = vperm.xlu0 %538, %v525
        %v540 = vpop.permute.xlu0 %539
        %543 = vset.pattern.permute.xlu0 0
        %544 = vperm.xlu0 %543, %v526
        %v545 = vpop.permute.xlu0 %544
        %548 = vset.pattern.permute.xlu0 0
        %549 = vperm.xlu0 %548, %v527
        %v550 = vpop.permute.xlu0 %549
        %v556 = vunpack.c.l.b16 %v520
        %v557 = vunpack.c.l.b16 %v521
        %v558 = vunpack.c.l.b16 %v522
        %v559 = vunpack.c.l.b16 %v523
        %v560 = vpack.c.b16 %v557, %v556
        %v561 = vpack.c.b16 %v559, %v558
        %vm562 = vcmask 261120
        %v564 = vsel %vm562, %v560, 0
        %v567 = vsel %vm562, %v561, 0
        %569 = vmatprep.subr.bf16.mxu0 0
        %570 = vmatpush1.bf16.msra.mxu0 0
        %571 = vmatprep.subr.bf16.mxu0 0
        %572 = vmatpush1.bf16.msra.mxu0 0
        %573 = vmatprep.subr.bf16.mxu0 0
        %574 = vmatpush1.bf16.msra.mxu0 0
        %575 = vmatprep.subr.bf16.mxu0 0
        %576 = vmatpush1.bf16.msra.mxu0 0
        %577 = vmatprep.subr.bf16.mxu0 0
        %578 = vmatpush1.bf16.msra.mxu0 0
        %579 = vmatprep.subr.bf16.mxu0 0
        %580 = vmatpush1.bf16.msra.mxu0 0
        %581 = vmatprep.subr.bf16.mxu0 %v531
        %582 = vmatpush1.bf16.msra.mxu0 %v530
        %583 = vmatprep.subr.bf16.mxu0 %v529
        %584 = vmatpush1.bf16.msra.mxu0 %v528
        %585 = vmatprep.subr.bf16.mxu0 0
        %586 = vmatpush2.bf16.msra.mxu0 0
        %587 = vmatprep.subr.bf16.mxu0 0
        %588 = vmatpush2.bf16.msra.mxu0 0
        %589 = vmatprep.subr.bf16.mxu0 0
        %590 = vmatpush2.bf16.msra.mxu0 0
        %591 = vmatprep.subr.bf16.mxu0 0
        %592 = vmatpush2.bf16.msra.mxu0 0
        %593 = vmatprep.subr.bf16.mxu0 0
        %594 = vmatpush2.bf16.msra.mxu0 0
        %595 = vmatprep.subr.bf16.mxu0 0
        %596 = vmatpush2.bf16.msra.mxu0 0
        %597 = vmatprep.subr.bf16.mxu0 0
        %598 = vmatpush2.bf16.msra.mxu0 0
        %599 = vmatprep.subr.bf16.mxu0 0
        %600 = vmatpush2.bf16.msra.mxu0 0
        %601 = vmatprep.mubr.bf16.mxu0 0
        %602 = vmatmul.mubr.bf16.gmra.mxu0 %v564
        %v603 = vpop.f32.mrf.mxu0
        %v604 = vadd.f32 %v535, %v603
        %v605 = vpop.f32.mrf.mxu0
        %v606 = vadd.f32 %v535, %v605
        %v607 = vpop.f32.mrf.mxu0
        %v608 = vadd.f32 %v540, %v607
        %v609 = vpop.f32.mrf.mxu0
        %v610 = vadd.f32 %v540, %v609
        %611 = vmatprep.mubr.bf16.mxu0 0
        %612 = vmatmul.mubr.bf16.gmra.mxu0 %v567
        %v613 = vpop.f32.mrf.mxu0
        %v614 = vadd.f32 %v545, %v613
        %v615 = vpop.f32.mrf.mxu0
        %v616 = vadd.f32 %v545, %v615
        %v617 = vpop.f32.mrf.mxu0
        %v618 = vadd.f32 %v550, %v617
        %v619 = vpop.f32.mrf.mxu0
        %v620 = vadd.f32 %v550, %v619
        %621 = vdwg.mxu0
        %vm622 = vcmp.gt.f32.partialorder %v604, 0.0
        %vm623 = vcmp.gt.f32.partialorder %v606, 0.0
        %vm624 = vcmp.gt.f32.partialorder %v608, 0.0
        %vm625 = vcmp.gt.f32.partialorder %v610, 0.0
        %vm626 = vcmp.gt.f32.partialorder %v614, 0.0
        %vm627 = vcmp.gt.f32.partialorder %v616, 0.0
        %vm628 = vcmp.gt.f32.partialorder %v618, 0.0
        %vm629 = vcmp.gt.f32.partialorder %v620, 0.0
        %v630 = vmul.f32 %v604, 0.01
        %v631 = vmul.f32 %v606, 0.01
        %v632 = vmul.f32 %v608, 0.01
        %v633 = vmul.f32 %v610, 0.01
        %v634 = vmul.f32 %v614, 0.01
        %v635 = vmul.f32 %v616, 0.01
        %v636 = vmul.f32 %v618, 0.01
        %v637 = vmul.f32 %v620, 0.01
        %v638 = vsel %vm622, %v604, %v630
        %v639 = vsel %vm623, %v606, %v631
        %v640 = vsel %vm624, %v608, %v632
        %v641 = vsel %vm625, %v610, %v633
        %v642 = vsel %vm626, %v614, %v634
        %v643 = vsel %vm627, %v616, %v635
        %v644 = vsel %vm628, %v618, %v636
        %v645 = vsel %vm629, %v620, %v637
        %v646 = vld [vmem:[%s1 + $0x40] sm:$0xf]
        %v647 = vld [vmem:[%s2 + $0x80] sm:$0xff]
        %v648 = vpack.c.bf16 %v640, %v638
        %v649 = vpack.c.bf16 %v641, %v639
        %v650 = vpack.c.bf16 %v644, %v642
        %v651 = vpack.c.bf16 %v645, %v643
        %653 = vset.pattern.permute.xlu0 0
        %654 = vperm.xlu0 %653, %v647
        %v655 = vpop.permute.xlu0 %654
        %v658 = vsel %vm562, %v646, 0
        %660 = vmatprep.subr.bf16.mxu0 0
        %661 = vmatpush1.bf16.msra.mxu0 0
        %662 = vmatprep.subr.bf16.mxu0 0
        %663 = vmatpush1.bf16.msra.mxu0 0
        %664 = vmatprep.subr.bf16.mxu0 0
        %665 = vmatpush1.bf16.msra.mxu0 0
        %666 = vmatprep.subr.bf16.mxu0 0
        %667 = vmatpush1.bf16.msra.mxu0 0
        %668 = vmatprep.subr.bf16.mxu0 0
        %669 = vmatpush1.bf16.msra.mxu0 0
        %670 = vmatprep.subr.bf16.mxu0 0
        %671 = vmatpush1.bf16.msra.mxu0 0
        %672 = vmatprep.subr.bf16.mxu0 %v651
        %673 = vmatpush1.bf16.msra.mxu0 %v650
        %674 = vmatprep.subr.bf16.mxu0 %v649
        %675 = vmatpush1.bf16.msra.mxu0 %v648
        %676 = vmatprep.subr.bf16.mxu0 0
        %677 = vmatpush2.bf16.msra.mxu0 0
        %678 = vmatprep.subr.bf16.mxu0 0
        %679 = vmatpush2.bf16.msra.mxu0 0
        %680 = vmatprep.subr.bf16.mxu0 0
        %681 = vmatpush2.bf16.msra.mxu0 0
        %682 = vmatprep.subr.bf16.mxu0 0
        %683 = vmatpush2.bf16.msra.mxu0 0
        %684 = vmatprep.subr.bf16.mxu0 0
        %685 = vmatpush2.bf16.msra.mxu0 0
        %686 = vmatprep.subr.bf16.mxu0 0
        %687 = vmatpush2.bf16.msra.mxu0 0
        %688 = vmatprep.subr.bf16.mxu0 0
        %689 = vmatpush2.bf16.msra.mxu0 0
        %690 = vmatprep.subr.bf16.mxu0 0
        %691 = vmatpush2.bf16.msra.mxu0 0
        %692 = vmatprep.mubr.bf16.mxu0 0
        %693 = vmatmul.mubr.bf16.gmra.mxu0 %v658
        %v694 = vpop.f32.mrf.mxu0
        %v695 = vadd.f32 %v655, %v694
        %v696 = vpop.f32.mrf.mxu0
        %v697 = vadd.f32 %v655, %v696
        %v698 = vpop.f32.mrf.mxu0
        %v699 = vpop.f32.mrf.mxu0
        %700 = vdwg.mxu0
        %v701 = vld [vmem:[%s1 + $0x48] sm:$0xf]
        %v702 = vld [vmem:[%s1 + $0x4c] sm:$0xf]
        %v703 = vld [vmem:[%s1 + $0x50] sm:$0xf]
        %v704 = vld [vmem:[%s1 + $0x54] sm:$0xf]
        %v705 = vld [vmem:[%s2 + $0x90] sm:$0xff]
        %v706 = vld [vmem:[%s2 + $0x98] sm:$0xff]
        %v707 = vld [vmem:[%s2 + $0xa0] sm:$0xff]
        %v708 = vld [vmem:[%s2 + $0xa8] sm:$0xff]
        %v709 = vpack.c.bf16 %v695, %v695
        %v710 = vpack.c.bf16 %v697, %v697
        %712 = vset.pattern.permute.xlu0 0
        %713 = vperm.xlu0 %712, %v705
        %v714 = vpop.permute.xlu0 %713
        %717 = vset.pattern.permute.xlu0 0
        %718 = vperm.xlu0 %717, %v706
        %v719 = vpop.permute.xlu0 %718
        %722 = vset.pattern.permute.xlu0 0
        %723 = vperm.xlu0 %722, %v707
        %v724 = vpop.permute.xlu0 %723
        %727 = vset.pattern.permute.xlu0 0
        %728 = vperm.xlu0 %727, %v708
        %v729 = vpop.permute.xlu0 %728
        %v735 = vunpack.c.l.b16 %v701
        %v736 = vunpack.c.l.b16 %v702
        %v737 = vunpack.c.l.b16 %v703
        %v738 = vunpack.c.l.b16 %v704
        %v739 = vpack.c.b16 %v736, %v735
        %v740 = vpack.c.b16 %v738, %v737
        %v742 = vsel %vm249, %v739, 0
        %v745 = vsel %vm249, %v740, 0
        %v748 = vsel %vm262, %v709, 0
        %v751 = vsel %vm262, %v710, 0
        %753 = vmatprep.subr.bf16.mxu0 0
        %754 = vmatpush1.bf16.msra.mxu0 0
        %755 = vmatprep.subr.bf16.mxu0 0
        %756 = vmatpush1.bf16.msra.mxu0 0
        %757 = vmatprep.subr.bf16.mxu0 0
        %758 = vmatpush1.bf16.msra.mxu0 0
        %759 = vmatprep.subr.bf16.mxu0 0
        %760 = vmatpush1.bf16.msra.mxu0 0
        %761 = vmatprep.subr.bf16.mxu0 0
        %762 = vmatpush1.bf16.msra.mxu0 0
        %763 = vmatprep.subr.bf16.mxu0 0
        %764 = vmatpush1.bf16.msra.mxu0 0
        %765 = vmatprep.subr.bf16.mxu0 0
        %766 = vmatpush1.bf16.msra.mxu0 0
        %767 = vmatprep.subr.bf16.mxu0 %v751
        %768 = vmatpush1.bf16.msra.mxu0 %v748
        %769 = vmatprep.subr.bf16.mxu0 0
        %770 = vmatpush2.bf16.msra.mxu0 0
        %771 = vmatprep.subr.bf16.mxu0 0
        %772 = vmatpush2.bf16.msra.mxu0 0
        %773 = vmatprep.subr.bf16.mxu0 0
        %774 = vmatpush2.bf16.msra.mxu0 0
        %775 = vmatprep.subr.bf16.mxu0 0
        %776 = vmatpush2.bf16.msra.mxu0 0
        %777 = vmatprep.subr.bf16.mxu0 0
        %778 = vmatpush2.bf16.msra.mxu0 0
        %779 = vmatprep.subr.bf16.mxu0 0
        %780 = vmatpush2.bf16.msra.mxu0 0
        %781 = vmatprep.subr.bf16.mxu0 0
        %782 = vmatpush2.bf16.msra.mxu0 0
        %783 = vmatprep.subr.bf16.mxu0 0
        %784 = vmatpush2.bf16.msra.mxu0 0
        %785 = vmatprep.mubr.bf16.mxu0 0
        %786 = vmatmul.mubr.bf16.gmra.mxu0 %v742
        %v787 = vpop.f32.mrf.mxu0
        %v788 = vadd.f32 %v714, %v787
        %v789 = vpop.f32.mrf.mxu0
        %v790 = vadd.f32 %v714, %v789
        %v791 = vpop.f32.mrf.mxu0
        %v792 = vadd.f32 %v719, %v791
        %v793 = vpop.f32.mrf.mxu0
        %v794 = vadd.f32 %v719, %v793
        %795 = vmatprep.mubr.bf16.mxu0 0
        %796 = vmatmul.mubr.bf16.gmra.mxu0 %v745
        %v797 = vpop.f32.mrf.mxu0
        %v798 = vadd.f32 %v724, %v797
        %v799 = vpop.f32.mrf.mxu0
        %v800 = vadd.f32 %v724, %v799
        %v801 = vpop.f32.mrf.mxu0
        %v802 = vadd.f32 %v729, %v801
        %v803 = vpop.f32.mrf.mxu0
        %v804 = vadd.f32 %v729, %v803
        %805 = vdwg.mxu0
        %vm806 = vcmp.gt.f32.partialorder %v788, 0.0
        %vm807 = vcmp.gt.f32.partialorder %v790, 0.0
        %vm808 = vcmp.gt.f32.partialorder %v792, 0.0
        %vm809 = vcmp.gt.f32.partialorder %v794, 0.0
        %vm810 = vcmp.gt.f32.partialorder %v798, 0.0
        %vm811 = vcmp.gt.f32.partialorder %v800, 0.0
        %vm812 = vcmp.gt.f32.partialorder %v802, 0.0
        %vm813 = vcmp.gt.f32.partialorder %v804, 0.0
        %v814 = vmul.f32 %v788, 0.01
        %v815 = vmul.f32 %v790, 0.01
        %v816 = vmul.f32 %v792, 0.01
        %v817 = vmul.f32 %v794, 0.01
        %v818 = vmul.f32 %v798, 0.01
        %v819 = vmul.f32 %v800, 0.01
        %v820 = vmul.f32 %v802, 0.01
        %v821 = vmul.f32 %v804, 0.01
        %v822 = vsel %vm806, %v788, %v814
        %v823 = vsel %vm807, %v790, %v815
        %v824 = vsel %vm808, %v792, %v816
        %v825 = vsel %vm809, %v794, %v817
        %v826 = vsel %vm810, %v798, %v818
        %v827 = vsel %vm811, %v800, %v819
        %v828 = vsel %vm812, %v802, %v820
        %v829 = vsel %vm813, %v804, %v821
        %v830 = vld [vmem:[%s1 + $0x58] sm:$0xf]
        %v831 = vld [vmem:[%s1 + $0x5c] sm:$0xf]
        %v832 = vld [vmem:[%s1 + $0x60] sm:$0xf]
        %v833 = vld [vmem:[%s1 + $0x64] sm:$0xf]
        %v834 = vld [vmem:[%s2 + $0xb0] sm:$0xff]
        %v835 = vld [vmem:[%s2 + $0xb8] sm:$0xff]
        %v836 = vld [vmem:[%s2 + $0xc0] sm:$0xff]
        %v837 = vld [vmem:[%s2 + $0xc8] sm:$0xff]
        %v838 = vpack.c.bf16 %v824, %v822
        %v839 = vpack.c.bf16 %v825, %v823
        %v840 = vpack.c.bf16 %v828, %v826
        %v841 = vpack.c.bf16 %v829, %v827
        %843 = vset.pattern.permute.xlu0 0
        %844 = vperm.xlu0 %843, %v834
        %v845 = vpop.permute.xlu0 %844
        %848 = vset.pattern.permute.xlu0 0
        %849 = vperm.xlu0 %848, %v835
        %v850 = vpop.permute.xlu0 %849
        %853 = vset.pattern.permute.xlu0 0
        %854 = vperm.xlu0 %853, %v836
        %v855 = vpop.permute.xlu0 %854
        %858 = vset.pattern.permute.xlu0 0
        %859 = vperm.xlu0 %858, %v837
        %v860 = vpop.permute.xlu0 %859
        %v866 = vunpack.c.l.b16 %v830
        %v867 = vunpack.c.l.b16 %v831
        %v868 = vunpack.c.l.b16 %v832
        %v869 = vunpack.c.l.b16 %v833
        %v870 = vpack.c.b16 %v867, %v866
        %v871 = vpack.c.b16 %v869, %v868
        %v873 = vsel %vm562, %v870, 0
        %v876 = vsel %vm562, %v871, 0
        %878 = vmatprep.subr.bf16.mxu0 0
        %879 = vmatpush1.bf16.msra.mxu0 0
        %880 = vmatprep.subr.bf16.mxu0 0
        %881 = vmatpush1.bf16.msra.mxu0 0
        %882 = vmatprep.subr.bf16.mxu0 0
        %883 = vmatpush1.bf16.msra.mxu0 0
        %884 = vmatprep.subr.bf16.mxu0 0
        %885 = vmatpush1.bf16.msra.mxu0 0
        %886 = vmatprep.subr.bf16.mxu0 0
        %887 = vmatpush1.bf16.msra.mxu0 0
        %888 = vmatprep.subr.bf16.mxu0 0
        %889 = vmatpush1.bf16.msra.mxu0 0
        %890 = vmatprep.subr.bf16.mxu0 %v841
        %891 = vmatpush1.bf16.msra.mxu0 %v840
        %892 = vmatprep.subr.bf16.mxu0 %v839
        %893 = vmatpush1.bf16.msra.mxu0 %v838
        %894 = vmatprep.subr.bf16.mxu0 0
        %895 = vmatpush2.bf16.msra.mxu0 0
        %896 = vmatprep.subr.bf16.mxu0 0
        %897 = vmatpush2.bf16.msra.mxu0 0
        %898 = vmatprep.subr.bf16.mxu0 0
        %899 = vmatpush2.bf16.msra.mxu0 0
        %900 = vmatprep.subr.bf16.mxu0 0
        %901 = vmatpush2.bf16.msra.mxu0 0
        %902 = vmatprep.subr.bf16.mxu0 0
        %903 = vmatpush2.bf16.msra.mxu0 0
        %904 = vmatprep.subr.bf16.mxu0 0
        %905 = vmatpush2.bf16.msra.mxu0 0
        %906 = vmatprep.subr.bf16.mxu0 0
        %907 = vmatpush2.bf16.msra.mxu0 0
        %908 = vmatprep.subr.bf16.mxu0 0
        %909 = vmatpush2.bf16.msra.mxu0 0
        %910 = vmatprep.mubr.bf16.mxu0 0
        %911 = vmatmul.mubr.bf16.gmra.mxu0 %v873
        %v912 = vpop.f32.mrf.mxu0
        %v913 = vadd.f32 %v845, %v912
        %v914 = vpop.f32.mrf.mxu0
        %v915 = vadd.f32 %v845, %v914
        %v916 = vpop.f32.mrf.mxu0
        %v917 = vadd.f32 %v850, %v916
        %v918 = vpop.f32.mrf.mxu0
        %v919 = vadd.f32 %v850, %v918
        %920 = vmatprep.mubr.bf16.mxu0 0
        %921 = vmatmul.mubr.bf16.gmra.mxu0 %v876
        %v922 = vpop.f32.mrf.mxu0
        %v923 = vadd.f32 %v855, %v922
        %v924 = vpop.f32.mrf.mxu0
        %v925 = vadd.f32 %v855, %v924
        %v926 = vpop.f32.mrf.mxu0
        %v927 = vadd.f32 %v860, %v926
        %v928 = vpop.f32.mrf.mxu0
        %v929 = vadd.f32 %v860, %v928
        %930 = vdwg.mxu0
        %vm931 = vcmp.gt.f32.partialorder %v913, 0.0
        %vm932 = vcmp.gt.f32.partialorder %v915, 0.0
        %vm933 = vcmp.gt.f32.partialorder %v917, 0.0
        %vm934 = vcmp.gt.f32.partialorder %v919, 0.0
        %vm935 = vcmp.gt.f32.partialorder %v923, 0.0
        %vm936 = vcmp.gt.f32.partialorder %v925, 0.0
        %vm937 = vcmp.gt.f32.partialorder %v927, 0.0
        %vm938 = vcmp.gt.f32.partialorder %v929, 0.0
        %v939 = vmul.f32 %v913, 0.01
        %v940 = vmul.f32 %v915, 0.01
        %v941 = vmul.f32 %v917, 0.01
        %v942 = vmul.f32 %v919, 0.01
        %v943 = vmul.f32 %v923, 0.01
        %v944 = vmul.f32 %v925, 0.01
        %v945 = vmul.f32 %v927, 0.01
        %v946 = vmul.f32 %v929, 0.01
        %v947 = vsel %vm931, %v913, %v939
        %v948 = vsel %vm932, %v915, %v940
        %v949 = vsel %vm933, %v917, %v941
        %v950 = vsel %vm934, %v919, %v942
        %v951 = vsel %vm935, %v923, %v943
        %v952 = vsel %vm936, %v925, %v944
        %v953 = vsel %vm937, %v927, %v945
        %v954 = vsel %vm938, %v929, %v946
        %v955 = vld [vmem:[%s1 + $0x68] sm:$0xf]
        %v956 = vld [vmem:[%s2 + $0xd0] sm:$0xff]
        %v957 = vpack.c.bf16 %v949, %v947
        %v958 = vpack.c.bf16 %v950, %v948
        %v959 = vpack.c.bf16 %v953, %v951
        %v960 = vpack.c.bf16 %v954, %v952
        %962 = vset.pattern.permute.xlu0 0
        %963 = vperm.xlu0 %962, %v956
        %v964 = vpop.permute.xlu0 %963
        %v967 = vsel %vm562, %v955, 0
        %969 = vmatprep.subr.bf16.mxu0 0
        %970 = vmatpush1.bf16.msra.mxu0 0
        %971 = vmatprep.subr.bf16.mxu0 0
        %972 = vmatpush1.bf16.msra.mxu0 0
        %973 = vmatprep.subr.bf16.mxu0 0
        %974 = vmatpush1.bf16.msra.mxu0 0
        %975 = vmatprep.subr.bf16.mxu0 0
        %976 = vmatpush1.bf16.msra.mxu0 0
        %977 = vmatprep.subr.bf16.mxu0 0
        %978 = vmatpush1.bf16.msra.mxu0 0
        %979 = vmatprep.subr.bf16.mxu0 0
        %980 = vmatpush1.bf16.msra.mxu0 0
        %981 = vmatprep.subr.bf16.mxu0 %v960
        %982 = vmatpush1.bf16.msra.mxu0 %v959
        %983 = vmatprep.subr.bf16.mxu0 %v958
        %984 = vmatpush1.bf16.msra.mxu0 %v957
        %985 = vmatprep.subr.bf16.mxu0 0
        %986 = vmatpush2.bf16.msra.mxu0 0
        %987 = vmatprep.subr.bf16.mxu0 0
        %988 = vmatpush2.bf16.msra.mxu0 0
        %989 = vmatprep.subr.bf16.mxu0 0
        %990 = vmatpush2.bf16.msra.mxu0 0
        %991 = vmatprep.subr.bf16.mxu0 0
        %992 = vmatpush2.bf16.msra.mxu0 0
        %993 = vmatprep.subr.bf16.mxu0 0
        %994 = vmatpush2.bf16.msra.mxu0 0
        %995 = vmatprep.subr.bf16.mxu0 0
        %996 = vmatpush2.bf16.msra.mxu0 0
        %997 = vmatprep.subr.bf16.mxu0 0
        %998 = vmatpush2.bf16.msra.mxu0 0
        %999 = vmatprep.subr.bf16.mxu0 0
        %1000 = vmatpush2.bf16.msra.mxu0 0
        %1001 = vmatprep.mubr.bf16.mxu0 0
        %1002 = vmatmul.mubr.bf16.gmra.mxu0 %v967
        %v1003 = vpop.f32.mrf.mxu0
        %v1004 = vadd.f32 %v964, %v1003
        %v1005 = vpop.f32.mrf.mxu0
        %v1006 = vadd.f32 %v964, %v1005
        %v1007 = vpop.f32.mrf.mxu0
        %v1008 = vpop.f32.mrf.mxu0
        %1009 = vdwg.mxu0
        %1010 = vst [vmem:[%s160] sm:$0xff] %v1004
        %1011 = vst [vmem:[%s160 + $0x8] sm:$0xff] %v1006
        %1012 = vst [vmem:[%s160 + $0x10] sm:$0xff] %v695
        %1013 = vst [vmem:[%s160 + $0x18] sm:$0xff] %v697
        %s1014 = sand.u32 %s90, 1
        %s1015 = sand.u32 %s90, 1
        %s1016 = smul.addr %s1015, 32
        %s1017 = scalar_lea.vmem [#allocation2], %s1016
        // Predicated region
        $region33: #{ae4_forward.1} parent=31 // pred_check
          %p1018 = pneg %p100
        $region34: #{ae4_forward.1} parent=31 // pred_check_branch
          %1020 = sbr.rel (%p1018) target = $region36
        $region35: #{ae4_forward.1} parent=31 // pred_region
          %s1021 = smul.u32 2, %s14
          %s1022 = smul.addr %s1021, 8
          %s1023 = scalar_lea.vmem %s3, %s1022
          // Predicated region
          $region37: #{ae4_forward.1} parent=35 // pred_check
            _
          $region38: #{ae4_forward.1} parent=35 // pred_check_branch
            %1025 = sbr.rel (0) target = $region40
          $region39: #{ae4_forward.1} parent=35 // pred_region
            // Predicated region
            $region41: #{ae4_forward.1} parent=39 // pred_check
              _
            $region42: #{ae4_forward.1} parent=39 // pred_check_branch
              %1027 = sbr.rel (0) target = $region44
            $region43: #{ae4_forward.1} parent=39 // pred_region
              loop: start=0, step=1, limit=1
              $region45: #{ae4_forward.1} parent=43 // loop_pre_header
                _
              $region46: #{ae4_forward.1} parent=43 // loop_header
                %s1029 = sphi 0, %s1033
                %p1030 = scmp.ge.s32.totalorder %s1029, 1
                %s1034 = sphi %s1017, %s1017
                %s1035 = sphi %s1023, %s1023
              $region47: #{ae4_forward.1} parent=43 // loop_header_branch
                %1032 = sbr.rel (%p1030) target = $region51
              $region48: #{ae4_forward.1} parent=43 // loop_body
                %v1036 = vld [vmem:[%s1034] sm:$0xff]
                %1037 = vst [vmem:[%s1035] sm:$0xff] %v1036
                %v1038 = vld [vmem:[%s1034 + $0x8] sm:$0xff]
                %1039 = vst [vmem:[%s1035 + $0x8] sm:$0xff] %v1038
                %v1040 = vld [vmem:[%s1034 + $0x10] sm:$0xff]
                %1041 = vst [vmem:[%s1035 + $0x20] sm:$0xff] %v1040
                %v1042 = vld [vmem:[%s1034 + $0x18] sm:$0xff]
                %1043 = vst [vmem:[%s1035 + $0x28] sm:$0xff] %v1042
              $region49: #{ae4_forward.1} parent=43 // loop_footer
                %s1033 = sadd.s32 1, %s1029
              $region50: #{ae4_forward.1} parent=43 // loop_footer_branch
                %1028 = sbr.rel target = $region46
              $region51: #{ae4_forward.1} parent=43 // loop_exit
                _
            $region44: #{ae4_forward.1} parent=39 // pred_fallthru
              _
            // Predicated region
            $region52: #{ae4_forward.1} parent=39 // pred_check
              _
            $region53: #{ae4_forward.1} parent=39 // pred_check_branch
              %1045 = sbr.rel target = $region55
            $region54: #{ae4_forward.1} parent=39 // pred_region
              _
            $region55: #{ae4_forward.1} parent=39 // pred_fallthru
              _
          $region40: #{ae4_forward.1} parent=35 // pred_fallthru
            _
          %1046 = vnop
        $region36: #{ae4_forward.1} parent=31 // pred_fallthru
          _
      $region32: #{ae4_forward.1} parent=5 // pred_fallthru
        _
      %p1047 = scmp.le.s32.totalorder 2, %s9
      // Predicated region
      $region56: #{ae4_forward.1} parent=5 // pred_check
        %p1048 = pneg %p1047
      $region57: #{ae4_forward.1} parent=5 // pred_check_branch
        %1050 = sbr.rel (%p1048) target = $region59
      $region58: #{ae4_forward.1} parent=5 // pred_region
        %s1051 = ssub.s32 %s9, 2
        // Predicated region
        $region60: #{ae4_forward.1} parent=58 // pred_check
          %p1052 = pneg %p106
        $region61: #{ae4_forward.1} parent=58 // pred_check_branch
          %1054 = sbr.rel (%p1052) target = $region63
        $region62: #{ae4_forward.1} parent=58 // pred_region
          %s1055 = sand.u32 %s91, 1
          %s1056 = sand.u32 %s91, 1
          %s1057 = smul.addr %s1056, 32
          %s1058 = scalar_lea.vmem [#allocation2], %s1057
        $region63: #{ae4_forward.1} parent=58 // pred_fallthru
          _
      $region59: #{ae4_forward.1} parent=5 // pred_fallthru
        _
    $region6: #{ae4_forward.1} parent=1 // loop_footer
      %s13 = sadd.s32 1, %s9
    $region7: #{ae4_forward.1} parent=1 // loop_footer_branch
      %8 = sbr.rel target = $region3
    $region8: #{ae4_forward.1} parent=1 // loop_exit
      _

</llo_original>
